<compile_context>
chip_gen: v7x
topology: tpu7x:2x2x1
jax: 0.10.0
libtpu: 0.0.40
codegen_flags: <defaults>
</compile_context>

<pallas_src>
import functools

import numpy as np
import jax
import jax.numpy as jnp
from jax.experimental import pallas as pl
from jax.experimental.pallas import tpu as pltpu


_TILE_ELEMS = 1024 * 1024            # ~4 MiB per f32 block
_VMEM_LIMIT = 48 * 1024 * 1024       # < 64 MiB physical on v7x, ample on v5e/v6e


def _add_pe_kernel(x_ref, pe_ref, o_ref):
    """Elementwise x + pe with float32 accumulation (VPU, memory-bound)."""
    x = x_ref[...].astype(jnp.float32)
    pe = pe_ref[...].astype(jnp.float32)
    o_ref[...] = (x + pe).astype(o_ref.dtype)


@functools.lru_cache(maxsize=None)
def _pe_buffer(seq_len: int, embed_dim: int, dtype) -> jax.Array:
    """Cached sinusoidal table, built with numpy outside any jitted graph.

    pe[p, 2i] = sin(p * w_i), pe[p, 2i+1] = cos(p * w_i) — identical to the
    PyTorch module's registered `pe` buffer (restricted to the needed seq_len).
    """
    idx_even = np.arange(0, embed_dim, 2, dtype=np.float32)
    freq_scale = np.exp(idx_even * (-np.log(np.float32(10000.0)) / embed_dim))
    position = np.arange(seq_len, dtype=np.float32)[:, None]
    angles = position * freq_scale                              # (S, D//2)
    # Interleave sin/cos instead of two strided scatters.
    pe = np.stack([np.sin(angles), np.cos(angles)], axis=-1).reshape(
        seq_len, embed_dim)
    return jnp.asarray(pe).astype(dtype)


def _round_tile(total: int, target: int) -> int:
    if total <= target:
        return total                    # full-extent last dim is always legal
    return max(128, (target // 128) * 128)   # lane-dense multiple of 128


@functools.partial(jax.jit, static_argnums=(2,))
def _pe_add(x: jax.Array, pe: jax.Array, tile_elems: int) -> jax.Array:
    B, S, D = x.shape
    total = S * D
    x_flat = x.reshape(B, 1, total)         # lane-dense flattened layout
    pe_flat = pe.reshape(1, 1, total)

    if B * total <= tile_elems:
        # Tiny input: single full-array block, no grid iteration overhead.
        pe_b = jnp.broadcast_to(pe_flat, (B, 1, total))
        out_flat = pl.pallas_call(
            _add_pe_kernel,
            out_shape=jax.ShapeDtypeStruct((B, 1, total), x.dtype),
            grid_spec=pl.GridSpec(
                grid=(1,),
                in_specs=[
                    pl.BlockSpec((B, 1, total), lambda i: (0, 0, 0)),   # x
                    pl.BlockSpec((B, 1, total), lambda i: (0, 0, 0)),   # pe
                ],
                out_specs=pl.BlockSpec((B, 1, total), lambda i: (0, 0, 0)),
            ),
            compiler_params=pltpu.CompilerParams(
                dimension_semantics=("arbitrary",),
                vmem_limit_bytes=_VMEM_LIMIT,
            ),
        )(x_flat, pe_b)
        return out_flat.reshape(B, S, D)

    tile = _round_tile(total, tile_elems)
    num_tiles = pl.cdiv(total, tile)

    out_flat = pl.pallas_call(
        _add_pe_kernel,
        out_shape=jax.ShapeDtypeStruct((B, 1, total), x.dtype),
        grid_spec=pl.GridSpec(
            # Batch is the innermost (fastest) grid axis; the pe block index is
            # independent of it, so Pallas skips re-fetching pe across batches.
            grid=(num_tiles, B),
            in_specs=[
                pl.BlockSpec((1, 1, tile), lambda c, b: (b, 0, c)),   # x
                pl.BlockSpec((1, 1, tile), lambda c, b: (0, 0, c)),   # pe
            ],
            out_specs=pl.BlockSpec((1, 1, tile), lambda c, b: (b, 0, c)),
        ),
        compiler_params=pltpu.CompilerParams(
            dimension_semantics=("parallel", "parallel"),
            vmem_limit_bytes=_VMEM_LIMIT,
        ),
    )(x_flat, pe_flat)
    return out_flat.reshape(B, S, D)


def positional_encoding(x: jax.Array, tile_elems: int = _TILE_ELEMS) -> jax.Array:
    """x: (B, S, D), D even. Returns x + pe[:S, :] in x.dtype (dropout p=0.0)."""
    B, S, D = x.shape
    assert D % 2 == 0, f"embed_dim ({D}) must be even"
    pe = _pe_buffer(S, D, x.dtype)          # cached "registered buffer"
    return _pe_add(x, pe, tile_elems)


def _reference(x: jax.Array) -> jax.Array:
    """Pure-JAX float32 reference mirroring the PyTorch module."""
    _, S, D = x.shape
    pe = _pe_buffer(S, D, jnp.float32)
    return x.astype(jnp.float32) + pe[None, :, :]


if __name__ == "__main__":
    key = jax.random.PRNGKey(0)

    # 1) Module-sized case (single-block fast path): B=2, S=8, D=32, float32.
    B, S, D = 2, 8, 32
    x = jax.random.normal(key, (B, S, D), dtype=jnp.float32)
    out = positional_encoding(x)
    jax.block_until_ready(out)
    ref = _reference(x)
    assert out.shape == (B, S, D)
    assert jnp.allclose(out, ref, atol=1e-5, rtol=1e-5), "f32 small-path mismatch"

    # 2) Tiled path with a partial last tile (total=1152, tile=256 -> 5 tiles).
    k2 = jax.random.PRNGKey(1)
    B2, S2, D2 = 2, 16, 72
    x2 = jax.random.normal(k2, (B2, S2, D2), dtype=jnp.float32)
    out2 = positional_encoding(x2, tile_elems=256)
    jax.block_until_ready(out2)
    ref2 = _reference(x2)
    assert jnp.allclose(out2, ref2, atol=1e-5, rtol=1e-5), "tiled-path mismatch"

    # 3) bf16 input: pe streamed in bf16, f32 accumulate, bf16 result.
    #    (PyTorch would promote the result to f32; documented divergence.)
    x3 = x.astype(jnp.bfloat16)
    out3 = positional_encoding(x3)
    jax.block_until_ready(out3)
    ref3 = _reference(x3).astype(jnp.bfloat16)
    assert jnp.allclose(out3.astype(jnp.float32), ref3.astype(jnp.float32),
                        atol=3e-2, rtol=3e-2), "bf16 mismatch"

    print("KERNEL_OK")
</pallas_src>

<mosaic_0001>
module attributes {stable_mosaic.version = 11 : i64} {
  func.func @_add_pe_kernel(%arg0: i32, %arg1: memref<2x1x256xf32, #tpu.memory_space<vmem>>, %arg2: memref<2x1x256xf32, #tpu.memory_space<vmem>>, %arg3: memref<2x1x256xf32, #tpu.memory_space<vmem>>) attributes {dimension_semantics = [#tpu.dimension_semantics<arbitrary>], iteration_bounds = array<i64: 1>, scalar_prefetch = 0 : i64, scratch_operands = 0 : i64, tpu.core_type = #tpu.core_type<tc>, window_params = [{pipeline_mode = #tpu.pipeline_mode<synchronous>, transform_indices = @transform_0, window_bounds = array<i64: 2, 1, 256>}, {pipeline_mode = #tpu.pipeline_mode<synchronous>, transform_indices = @transform_1, window_bounds = array<i64: 2, 1, 256>}, {pipeline_mode = #tpu.pipeline_mode<synchronous>, transform_indices = @transform_2, window_bounds = array<i64: 2, 1, 256>}]} {
    %c0 = arith.constant 0 : index
    %c0_0 = arith.constant 0 : index
    %c0_1 = arith.constant 0 : index
    %0 = vector.load %arg1[%c0, %c0_0, %c0_1] : memref<2x1x256xf32, #tpu.memory_space<vmem>>, vector<2x1x256xf32>
    %c0_2 = arith.constant 0 : index
    %c0_3 = arith.constant 0 : index
    %c0_4 = arith.constant 0 : index
    %1 = vector.load %arg2[%c0_2, %c0_3, %c0_4] : memref<2x1x256xf32, #tpu.memory_space<vmem>>, vector<2x1x256xf32>
    %2 = arith.addf %0, %1 : vector<2x1x256xf32>
    %c0_5 = arith.constant 0 : index
    %c0_6 = arith.constant 0 : index
    %c0_7 = arith.constant 0 : index
    %3 = vector.load %arg3[%c0_5, %c0_6, %c0_7] : memref<2x1x256xf32, #tpu.memory_space<vmem>>, vector<2x1x256xf32>
    tpu.vector_store %arg3[%c0_5, %c0_6, %c0_7], %2 {strides = array<i32>} : memref<2x1x256xf32, #tpu.memory_space<vmem>>, vector<2x1x256xf32>,
    return
  }
  func.func @transform_0(%arg0: i32) -> (i32, i32, i32) {
    %c0_i32 = arith.constant 0 : i32
    %c0_i32_0 = arith.constant 0 : i32
    %c0_i32_1 = arith.constant 0 : i32
    %c0_i32_2 = arith.constant 0 : i32
    return %c0_i32, %c0_i32_0, %c0_i32_1 : i32, i32, i32
  }
  func.func @transform_1(%arg0: i32) -> (i32, i32, i32) {
    %c0_i32 = arith.constant 0 : i32
    %c0_i32_0 = arith.constant 0 : i32
    %c0_i32_1 = arith.constant 0 : i32
    %c0_i32_2 = arith.constant 0 : i32
    return %c0_i32, %c0_i32_0, %c0_i32_1 : i32, i32, i32
  }
  func.func @transform_2(%arg0: i32) -> (i32, i32, i32) {
    %c0_i32 = arith.constant 0 : i32
    %c0_i32_0 = arith.constant 0 : i32
    %c0_i32_1 = arith.constant 0 : i32
    %c0_i32_2 = arith.constant 0 : i32
    return %c0_i32, %c0_i32_0, %c0_i32_1 : i32, i32, i32
  }
}

</mosaic_0001>

<llo_original>
// kernel: _pe_add.1
$region0: #{_pe_add.1}
  #allocation0 [shape = 'u32[]', space=smem, size = 0x4, offset = 0x4, fixed_abs, tag = 'smem constant byte address 0x4 - core index']
  #allocation1 [shape = 'u32[144,128]{1,0:T(1,128)}', space=vmem, size = 0x12000, scoped, tag = 'internal scratch']
  %s0 = inlined_call_operand.vmem [shape: f32[2,1,256], index: 0, kind: input, shape index: {}]
  %s1 = inlined_call_operand.vmem [shape: f32[2,1,256], index: 1, kind: input, shape index: {}]
  %s2 = inlined_call_operand.vmem [shape: f32[2,1,256], index: 2, kind: output, shape index: {}]
  %s3 = sld [smem:[#allocation0]]
  $region18: #{_pe_add.1} parent=0
    _
  %s5 = ssub.s32 1, %s3
  %s6 = scalar_select 0, %s5, %s3
  // Predicated region
  $region2: #{_pe_add.1} parent=0 // pred_check
    _
  $region3: #{_pe_add.1} parent=0 // pred_check_branch
    %8 = sbr.rel (0) target = $region5
  $region4: #{_pe_add.1} parent=0 // pred_region
    _
  $region5: #{_pe_add.1} parent=0 // pred_fallthru
    _
  // Predicated region
  $region6: #{_pe_add.1} parent=0 // pred_check
    _
  $region7: #{_pe_add.1} parent=0 // pred_check_branch
    %10 = sbr.rel (0) target = $region9
  $region8: #{_pe_add.1} parent=0 // pred_region
    _
  $region9: #{_pe_add.1} parent=0 // pred_fallthru
    _
  %v11 = vld [vmem:[%s0] sm:$0x3]
  %v12 = vld [vmem:[%s0 + $0x2] sm:$0x3]
  %v13 = vld [vmem:[%s1] sm:$0x3]
  %v14 = vld [vmem:[%s1 + $0x2] sm:$0x3]
  %v15 = vadd.f32 %v11, %v13
  %v16 = vadd.f32 %v12, %v14
  %v17 = vlaneseq
  %vm18 = vcmp.ge.s32.totalorder %v17, 0
  %vm19 = vcmp.lt.s32.totalorder %v17, 256
  %vm20 = vmand %vm18, %vm19
  %21 = vst.msk [vmem:[%s2] sm:$0x3] %vm20, %v15
  %22 = vst.msk [vmem:[%s2 + $0x2] sm:$0x3] %vm20, %v16
  // Predicated region
  $region10: #{_pe_add.1} parent=0 // pred_check
    _
  $region11: #{_pe_add.1} parent=0 // pred_check_branch
    %24 = sbr.rel (0) target = $region13
  $region12: #{_pe_add.1} parent=0 // pred_region
    _
  $region13: #{_pe_add.1} parent=0 // pred_fallthru
    _
  // Predicated region
  $region14: #{_pe_add.1} parent=0 // pred_check
    _
  $region15: #{_pe_add.1} parent=0 // pred_check_branch
    %26 = sbr.rel (0) target = $region17
  $region16: #{_pe_add.1} parent=0 // pred_region
    _
  $region17: #{_pe_add.1} parent=0 // pred_fallthru
    _

</llo_original>
